<compile_context>
chip_gen: v6e
topology: v6e:2x2x1
jax: 0.10.0
libtpu: 0.0.40
codegen_flags: <defaults>
</compile_context>

<pallas_src>
import jax
import jax.numpy as jnp
from jax.experimental import pallas as pl
from jax.experimental.pallas import tpu as pltpu

IN_FEATURES = 100


def _round_up(n, m):
    return ((n + m - 1) // m) * m


def _cdiv(a, b):
    return (a + b - 1) // b


def _sigmoid(x):
    # Single EUP transcendental (tanh); the mul/adds ride otherwise-idle VALU slots.
    return 0.5 * jnp.tanh(0.5 * x) + 0.5


def adj_order_kernel(xt_ref, w1_ref, w2_ref, w3_ref, b_ref, o_ref):
    h1d = w1_ref.shape[0]
    h2d = w2_ref.shape[0]

    b = b_ref[...]                      # (h1+h2+1, 1) consolidated biases (f32)
    b1 = b[:h1d, :]                     # (h1, 1)
    b2 = b[h1d:h1d + h2d, :]            # (h2, 1)
    b3 = b[h1d + h2d:, :]               # (1, 1)

    # Layer 1: (h1,100) @ (100,tile_b) on the MXU, bf16 operands, f32 accumulate.
    h1 = jnp.dot(w1_ref[...], xt_ref[...], preferred_element_type=jnp.float32)
    h1 = _sigmoid(h1 + b1)              # (h1, tile_b), lane-dense f32

    # Layer 2: (h2,h1) @ (h1,tile_b).
    h2 = jnp.dot(w2_ref[...], h1.astype(jnp.bfloat16),
                 preferred_element_type=jnp.float32)
    h2 = _sigmoid(h2 + b2)              # (h2, tile_b)

    # Layer 3: single-output row dot as a VPU mul + sublane (XLU) reduction.
    y = jnp.sum(h2 * w3_ref[...], axis=0, keepdims=True)   # (1, tile_b)
    o_ref[...] = _sigmoid(y + b3).astype(o_ref.dtype)


def adj_order_forward(x, params, max_tile_b=512):
    """params = (w1 (h1,100), w2 (h2,h1), w3_col (h2,1), b_all (h1+h2+1,1)), all f32."""
    w1, w2, w3_col, b_all = params
    B = x.shape[0]

    # bf16 weights for the MXU.
    w1_bf = w1.astype(jnp.bfloat16)
    w2_bf = w2.astype(jnp.bfloat16)

    # Tile policy: amortize ~0.35us/step overhead with big tiles, keep >=2 tiles
    # once B > 128 so v7x's second TensorCore shares the batch axis, and avoid
    # the old round_up(B, tile_b) padding blowup.
    num_tiles = max(_cdiv(B, max_tile_b), min(2, _cdiv(B, 128)))
    tile_b = _round_up(_cdiv(B, num_tiles), 128)
    padded_b = num_tiles * tile_b

    # Batch on the lane axis; bf16 halves the dominant HBM stream.
    xt = x.T.astype(jnp.bfloat16)                       # (100, B)
    if padded_b != B:
        xt = jnp.pad(xt, ((0, 0), (0, padded_b - B)))

    def const(a):
        # Full-extent block, constant index_map -> VMEM-resident across grid steps.
        return pl.BlockSpec(a.shape, lambda i: (0,) * a.ndim)

    out = pl.pallas_call(
        adj_order_kernel,
        out_shape=jax.ShapeDtypeStruct((1, padded_b), jnp.float32),
        grid=(num_tiles,),
        in_specs=[
            pl.BlockSpec((IN_FEATURES, tile_b), lambda i: (0, i)),
            const(w1_bf),
            const(w2_bf),
            const(w3_col),
            const(b_all),
        ],
        out_specs=pl.BlockSpec((1, tile_b), lambda i: (0, i)),
        compiler_params=pltpu.CompilerParams(
            dimension_semantics=("parallel",)),
    )(xt, w1_bf, w2_bf, w3_col, b_all)
    return out[0, :B].reshape(B, 1)


def init_params(key, hidden_dim1, hidden_dim2):
    """PyTorch-style uniform(-1/sqrt(fan_in), 1/sqrt(fan_in)) init, f32 master copy.

    Weights are stored PyTorch-native (out, in); biases as columns.
    """
    dims = [(IN_FEATURES, hidden_dim1), (hidden_dim1, hidden_dim2),
            (hidden_dim2, 1)]
    ws, bs = [], []
    for fan_in, fan_out in dims:
        key, kw, kb = jax.random.split(key, 3)
        bound = 1.0 / jnp.sqrt(float(fan_in))
        ws.append(jax.random.uniform(kw, (fan_out, fan_in), jnp.float32,
                                     -bound, bound))
        bs.append(jax.random.uniform(kb, (fan_out, 1), jnp.float32,
                                     -bound, bound))
    w1, w2, w3 = ws
    w3_col = w3.T                               # (hidden_dim2, 1)
    b_all = jnp.concatenate(bs, axis=0)         # (h1 + h2 + 1, 1)
    return w1, w2, w3_col, b_all


def reference_forward(x, params):
    """Pure-f32 reference matching the PyTorch module semantics."""
    w1, w2, w3_col, b_all = params
    h1d, h2d = w1.shape[0], w2.shape[0]
    b1 = b_all[:h1d, 0]
    b2 = b_all[h1d:h1d + h2d, 0]
    b3 = b_all[h1d + h2d:, 0]
    h1 = jax.nn.sigmoid(x @ w1.T + b1)
    h2 = jax.nn.sigmoid(h1 @ w2.T + b2)
    return jax.nn.sigmoid(h2 @ w3_col + b3)


if __name__ == "__main__":
    hidden_dim1, hidden_dim2 = 32, 16
    batch = 8

    key = jax.random.PRNGKey(0)
    key, kx = jax.random.split(key)
    x = jax.random.normal(kx, (batch, IN_FEATURES), jnp.float32)
    params = init_params(key, hidden_dim1, hidden_dim2)

    y = adj_order_forward(x, params)
    jax.block_until_ready(y)

    y_ref = reference_forward(x, params)
    assert y.shape == (batch, 1), y.shape
    # bf16 matmul operands => slightly loosened tolerance vs the f32 reference.
    assert jnp.allclose(y, y_ref, atol=2e-2, rtol=2e-2), (y, y_ref)

    print("KERNEL_OK")
</pallas_src>

<mosaic_0001>
module attributes {stable_mosaic.version = 11 : i64} {
  func.func @adj_order_kernel(%arg0: i32, %arg1: memref<100x128xbf16, #tpu.memory_space<vmem>>, %arg2: memref<32x100xbf16, #tpu.memory_space<vmem>>, %arg3: memref<16x32xbf16, #tpu.memory_space<vmem>>, %arg4: memref<16x1xf32, #tpu.memory_space<vmem>>, %arg5: memref<49x1xf32, #tpu.memory_space<vmem>>, %arg6: memref<1x128xf32, #tpu.memory_space<vmem>>) attributes {dimension_semantics = [#tpu.dimension_semantics<parallel>], iteration_bounds = array<i64: 1>, scalar_prefetch = 0 : i64, scratch_operands = 0 : i64, tpu.core_type = #tpu.core_type<tc>, window_params = [{transform_indices = @transform_0, window_bounds = array<i64: 100, 128>}, {pipeline_mode = #tpu.pipeline_mode<synchronous>, transform_indices = @transform_1, window_bounds = array<i64: 32, 100>}, {pipeline_mode = #tpu.pipeline_mode<synchronous>, transform_indices = @transform_2, window_bounds = array<i64: 16, 32>}, {pipeline_mode = #tpu.pipeline_mode<synchronous>, transform_indices = @transform_3, window_bounds = array<i64: 16, 1>}, {pipeline_mode = #tpu.pipeline_mode<synchronous>, transform_indices = @transform_4, window_bounds = array<i64: 49, 1>}, {transform_indices = @transform_5, window_bounds = array<i64: 1, 128>}]} {
    %c0 = arith.constant 0 : index
    %c0_0 = arith.constant 0 : index
    %0 = vector.load %arg5[%c0, %c0_0] : memref<49x1xf32, #tpu.memory_space<vmem>>, vector<49x1xf32>
    %1 = vector.extract_strided_slice %0 {offsets = [0, 0], sizes = [32, 1], strides = [1, 1]} : vector<49x1xf32> to vector<32x1xf32>
    %2 = vector.extract_strided_slice %0 {offsets = [32, 0], sizes = [16, 1], strides = [1, 1]} : vector<49x1xf32> to vector<16x1xf32>
    %3 = vector.extract_strided_slice %0 {offsets = [48, 0], sizes = [1, 1], strides = [1, 1]} : vector<49x1xf32> to vector<1x1xf32>
    %c0_1 = arith.constant 0 : index
    %c0_2 = arith.constant 0 : index
    %4 = vector.load %arg2[%c0_1, %c0_2] : memref<32x100xbf16, #tpu.memory_space<vmem>>, vector<32x100xbf16>
    %c0_3 = arith.constant 0 : index
    %c0_4 = arith.constant 0 : index
    %5 = vector.load %arg1[%c0_3, %c0_4] : memref<100x128xbf16, #tpu.memory_space<vmem>>, vector<100x128xbf16>
    %cst = arith.constant dense<0.000000e+00> : vector<32x128xf32>
    %6 = tpu.matmul %4, %5, %cst {dimension_numbers = #tpu.dot_dimension_numbers<[1], [0], [0], [1], [0, 0, 1, 1], [], []>} : vector<32x100xbf16>, vector<100x128xbf16>, vector<32x128xf32> -> vector<32x128xf32>
    %7 = vector.broadcast %1 : vector<32x1xf32> to vector<32x128xf32>
    %8 = arith.addf %6, %7 : vector<32x128xf32>
    %cst_5 = arith.constant 5.000000e-01 : f32
    %9 = vector.broadcast %cst_5 : f32 to vector<32x128xf32>
    %10 = arith.mulf %9, %8 : vector<32x128xf32>
    %11 = math.tanh %10 : vector<32x128xf32>
    %cst_6 = arith.constant 5.000000e-01 : f32
    %12 = vector.broadcast %cst_6 : f32 to vector<32x128xf32>
    %13 = arith.mulf %12, %11 : vector<32x128xf32>
    %cst_7 = arith.constant 5.000000e-01 : f32
    %14 = vector.broadcast %cst_7 : f32 to vector<32x128xf32>
    %15 = arith.addf %13, %14 : vector<32x128xf32>
    %c0_8 = arith.constant 0 : index
    %c0_9 = arith.constant 0 : index
    %16 = vector.load %arg3[%c0_8, %c0_9] : memref<16x32xbf16, #tpu.memory_space<vmem>>, vector<16x32xbf16>
    %17 = arith.truncf %15 : vector<32x128xf32> to vector<32x128xbf16>
    %cst_10 = arith.constant dense<0.000000e+00> : vector<16x128xf32>
    %18 = tpu.matmul %16, %17, %cst_10 {dimension_numbers = #tpu.dot_dimension_numbers<[1], [0], [0], [1], [0, 0, 1, 1], [], []>} : vector<16x32xbf16>, vector<32x128xbf16>, vector<16x128xf32> -> vector<16x128xf32>
    %19 = vector.broadcast %2 : vector<16x1xf32> to vector<16x128xf32>
    %20 = arith.addf %18, %19 : vector<16x128xf32>
    %cst_11 = arith.constant 5.000000e-01 : f32
    %21 = vector.broadcast %cst_11 : f32 to vector<16x128xf32>
    %22 = arith.mulf %21, %20 : vector<16x128xf32>
    %23 = math.tanh %22 : vector<16x128xf32>
    %cst_12 = arith.constant 5.000000e-01 : f32
    %24 = vector.broadcast %cst_12 : f32 to vector<16x128xf32>
    %25 = arith.mulf %24, %23 : vector<16x128xf32>
    %cst_13 = arith.constant 5.000000e-01 : f32
    %26 = vector.broadcast %cst_13 : f32 to vector<16x128xf32>
    %27 = arith.addf %25, %26 : vector<16x128xf32>
    %c0_14 = arith.constant 0 : index
    %c0_15 = arith.constant 0 : index
    %28 = vector.load %arg4[%c0_14, %c0_15] : memref<16x1xf32, #tpu.memory_space<vmem>>, vector<16x1xf32>
    %29 = vector.broadcast %28 : vector<16x1xf32> to vector<16x128xf32>
    %30 = arith.mulf %27, %29 : vector<16x128xf32>
    %cst_16 = arith.constant dense<0.000000e+00> : vector<128xf32>
    %31 = vector.multi_reduction <add>, %30, %cst_16 [0] : vector<16x128xf32> to vector<128xf32>
    %32 = vector.shape_cast %31 : vector<128xf32> to vector<1x128xf32>
    %33 = vector.broadcast %3 : vector<1x1xf32> to vector<1x128xf32>
    %34 = arith.addf %32, %33 : vector<1x128xf32>
    %cst_17 = arith.constant 5.000000e-01 : f32
    %35 = vector.broadcast %cst_17 : f32 to vector<1x128xf32>
    %36 = arith.mulf %35, %34 : vector<1x128xf32>
    %37 = math.tanh %36 : vector<1x128xf32>
    %cst_18 = arith.constant 5.000000e-01 : f32
    %38 = vector.broadcast %cst_18 : f32 to vector<1x128xf32>
    %39 = arith.mulf %38, %37 : vector<1x128xf32>
    %cst_19 = arith.constant 5.000000e-01 : f32
    %40 = vector.broadcast %cst_19 : f32 to vector<1x128xf32>
    %41 = arith.addf %39, %40 : vector<1x128xf32>
    %c0_20 = arith.constant 0 : index
    %c0_21 = arith.constant 0 : index
    %42 = vector.load %arg6[%c0_20, %c0_21] : memref<1x128xf32, #tpu.memory_space<vmem>>, vector<1x128xf32>
    tpu.vector_store %arg6[%c0_20, %c0_21], %41 {strides = array<i32>} : memref<1x128xf32, #tpu.memory_space<vmem>>, vector<1x128xf32>,
    return
  }
  func.func @transform_0(%arg0: i32) -> (i32, i32) {
    %c0_i32 = arith.constant 0 : i32
    %c0_i32_0 = arith.constant 0 : i32
    return %c0_i32, %arg0 : i32, i32
  }
  func.func @transform_1(%arg0: i32) -> (i32, i32) {
    %c0_i32 = arith.constant 0 : i32
    %c0_i32_0 = arith.constant 0 : i32
    %c0_i32_1 = arith.constant 0 : i32
    return %c0_i32, %c0_i32_0 : i32, i32
  }
  func.func @transform_2(%arg0: i32) -> (i32, i32) {
    %c0_i32 = arith.constant 0 : i32
    %c0_i32_0 = arith.constant 0 : i32
    %c0_i32_1 = arith.constant 0 : i32
    return %c0_i32, %c0_i32_0 : i32, i32
  }
  func.func @transform_3(%arg0: i32) -> (i32, i32) {
    %c0_i32 = arith.constant 0 : i32
    %c0_i32_0 = arith.constant 0 : i32
    %c0_i32_1 = arith.constant 0 : i32
    return %c0_i32, %c0_i32_0 : i32, i32
  }
  func.func @transform_4(%arg0: i32) -> (i32, i32) {
    %c0_i32 = arith.constant 0 : i32
    %c0_i32_0 = arith.constant 0 : i32
    %c0_i32_1 = arith.constant 0 : i32
    return %c0_i32, %c0_i32_0 : i32, i32
  }
  func.func @transform_5(%arg0: i32) -> (i32, i32) {
    %c0_i32 = arith.constant 0 : i32
    %c0_i32_0 = arith.constant 0 : i32
    return %c0_i32, %arg0 : i32, i32
  }
}

</mosaic_0001>

<llo_original>
// kernel: tpu_custom_call.1
$region0: #{tpu_custom_call.1}
  #allocation0 [shape = 'u32[]', space=smem, size = 0x4, offset = 0x4, fixed_abs, tag = 'smem constant byte address 0x4 - core index']
  #allocation1 [shape = 'u32[144,128]{1,0:T(1,128)}', space=vmem, size = 0x12000, scoped, tag = 'internal scratch']
  %s0 = inlined_call_operand.vmem [shape: bf16[100,128], index: 0, kind: input, shape index: {}]
  %s1 = inlined_call_operand.vmem [shape: bf16[32,100], index: 1, kind: input, shape index: {}]
  %s2 = inlined_call_operand.vmem [shape: bf16[16,32], index: 2, kind: input, shape index: {}]
  %s3 = inlined_call_operand.vmem [shape: f32[16,1], index: 3, kind: input, shape index: {}]
  %s4 = inlined_call_operand.vmem [shape: f32[49,1], index: 4, kind: input, shape index: {}]
  %s5 = inlined_call_operand.hbm [shape: f32[1,128], index: 5, kind: output, shape index: {}]
  %s6 = sld [smem:[#allocation0]]
  $region30: #{tpu_custom_call.1} parent=0
    _
  %s8 = ssub.s32 1, %s6
  %s9 = scalar_select 0, %s8, %s6
  $region1: #{tpu_custom_call.1} parent=0
    #allocation2 [shape = 'u8[512]{0}', space=vmem, size = 0x400, scoped, tag = 'output window, operand 0, single buffered']
    #allocation3 [shape = 's32[1]{0}', space=sflag, size = 0x4, scoped, tag = 'scoped memory for tpu_custom_call.1']
    %10 = vsyncpa [#allocation3], 0
    // Predicated region
    $region2: #{tpu_custom_call.1} parent=1 // pred_check
      _
    $region3: #{tpu_custom_call.1} parent=1 // pred_check_branch
      %12 = sbr.rel (0) target = $region5
    $region4: #{tpu_custom_call.1} parent=1 // pred_region
      _
    $region5: #{tpu_custom_call.1} parent=1 // pred_fallthru
      _
    // Predicated region
    $region6: #{tpu_custom_call.1} parent=1 // pred_check
      _
    $region7: #{tpu_custom_call.1} parent=1 // pred_check_branch
      %14 = sbr.rel (0) target = $region9
    $region8: #{tpu_custom_call.1} parent=1 // pred_region
      _
    $region9: #{tpu_custom_call.1} parent=1 // pred_fallthru
      _
    // Predicated region
    $region10: #{tpu_custom_call.1} parent=1 // pred_check
      _
    $region11: #{tpu_custom_call.1} parent=1 // pred_check_branch
      %16 = sbr.rel (0) target = $region13
    $region12: #{tpu_custom_call.1} parent=1 // pred_region
      _
    $region13: #{tpu_custom_call.1} parent=1 // pred_fallthru
      _
    // Predicated region
    $region14: #{tpu_custom_call.1} parent=1 // pred_check
      _
    $region15: #{tpu_custom_call.1} parent=1 // pred_check_branch
      %18 = sbr.rel (0) target = $region17
    $region16: #{tpu_custom_call.1} parent=1 // pred_region
      _
    $region17: #{tpu_custom_call.1} parent=1 // pred_fallthru
      _
    // Predicated region
    $region18: #{tpu_custom_call.1} parent=1 // pred_check
      _
    $region19: #{tpu_custom_call.1} parent=1 // pred_check_branch
      %20 = sbr.rel (0) target = $region21
    $region20: #{tpu_custom_call.1} parent=1 // pred_region
      _
    $region21: #{tpu_custom_call.1} parent=1 // pred_fallthru
      _
    %v22 = vld [vmem:[%s4] sm:$0xff]
    %v23 = vld [vmem:[%s4 + $0x8] sm:$0xff]
    %v24 = vld [vmem:[%s4 + $0x10] sm:$0xff]
    %v25 = vld [vmem:[%s4 + $0x18] sm:$0xff]
    %v26 = vld [vmem:[%s4 + $0x20] sm:$0xff]
    %v27 = vld [vmem:[%s4 + $0x28] sm:$0xff]
    %v28 = vld [vmem:[%s4 + $0x30] sm:$0x1]
    %v29 = vld [vmem:[%s1] sm:$0xf]
    %v30 = vld [vmem:[%s1 + $0x4] sm:$0xf]
    %v31 = vld [vmem:[%s1 + $0x8] sm:$0xf]
    %v32 = vld [vmem:[%s1 + $0xc] sm:$0xf]
    %v33 = vld [vmem:[%s0] sm:$0xf]
    %v34 = vld [vmem:[%s0 + $0x4] sm:$0xf]
    %v35 = vld [vmem:[%s0 + $0x8] sm:$0xf]
    %v36 = vld [vmem:[%s0 + $0xc] sm:$0xf]
    %v37 = vld [vmem:[%s0 + $0x10] sm:$0xf]
    %v38 = vld [vmem:[%s0 + $0x14] sm:$0xf]
    %v39 = vld [vmem:[%s0 + $0x18] sm:$0xf]
    %v40 = vld [vmem:[%s0 + $0x1c] sm:$0xf]
    %v41 = vld [vmem:[%s0 + $0x20] sm:$0xf]
    %v42 = vld [vmem:[%s0 + $0x24] sm:$0xf]
    %v43 = vld [vmem:[%s0 + $0x28] sm:$0xf]
    %v44 = vld [vmem:[%s0 + $0x2c] sm:$0xf]
    %v45 = vld [vmem:[%s0 + $0x30] sm:$0x3]
    %47 = vset.pattern.permute.xlu0 0
    %48 = vperm.xlu0 %47, %v22
    %v49 = vpop.permute.xlu0 %48
    %52 = vset.pattern.permute.xlu0 0
    %53 = vperm.xlu0 %52, %v23
    %v54 = vpop.permute.xlu0 %53
    %57 = vset.pattern.permute.xlu0 0
    %58 = vperm.xlu0 %57, %v24
    %v59 = vpop.permute.xlu0 %58
    %62 = vset.pattern.permute.xlu0 0
    %63 = vperm.xlu0 %62, %v25
    %v64 = vpop.permute.xlu0 %63
    %v70 = vunpack.c.l.b16 %v29
    %v71 = vunpack.c.l.b16 %v30
    %v72 = vunpack.c.l.b16 %v31
    %v73 = vunpack.c.l.b16 %v32
    %v74 = vpack.c.b16 %v71, %v70
    %v75 = vpack.c.b16 %v73, %v72
    %v89 = vunpack.c.l.b16 %v33
    %v90 = vunpack.c.l.b16 %v34
    %v91 = vunpack.c.l.b16 %v35
    %v92 = vunpack.c.l.b16 %v36
    %v93 = vunpack.c.l.b16 %v37
    %v94 = vunpack.c.l.b16 %v38
    %v95 = vunpack.c.l.b16 %v39
    %v96 = vunpack.c.l.b16 %v40
    %v97 = vunpack.c.l.b16 %v41
    %v98 = vunpack.c.l.b16 %v42
    %v99 = vunpack.c.l.b16 %v43
    %v100 = vunpack.c.l.b16 %v44
    %v101 = vunpack.c.l.b16 %v45
    %v102 = vpack.c.b16 %v90, %v89
    %v103 = vpack.c.b16 %v92, %v91
    %v104 = vpack.c.b16 %v94, %v93
    %v105 = vpack.c.b16 %v96, %v95
    %v106 = vpack.c.b16 %v98, %v97
    %v107 = vpack.c.b16 %v100, %v99
    %v108 = vpack.c.b16 %v101, %v101
    %vm115 = vcmask 818176
    %v117 = vsel %vm115, %v74, 0
    %v120 = vsel %vm115, %v75, 0
    %vm122 = vcmask 1041408
    %v124 = vsel %vm122, %v108, 0
    %126 = vmatprep.subr.bf16.mxu0 0
    %127 = vmatpush1.bf16.msra.mxu0 0
    %128 = vmatprep.subr.bf16.mxu0 0
    %129 = vmatpush1.bf16.msra.mxu0 %v124
    %130 = vmatprep.subr.bf16.mxu0 0
    %131 = vmatpush1.bf16.msra.mxu0 %v107
    %132 = vmatprep.subr.bf16.mxu0 0
    %133 = vmatpush1.bf16.msra.mxu0 %v106
    %134 = vmatprep.subr.bf16.mxu0 0
    %135 = vmatpush1.bf16.msra.mxu0 %v105
    %136 = vmatprep.subr.bf16.mxu0 0
    %137 = vmatpush1.bf16.msra.mxu0 %v104
    %138 = vmatprep.subr.bf16.mxu0 0
    %139 = vmatpush1.bf16.msra.mxu0 %v103
    %140 = vmatprep.subr.bf16.mxu0 0
    %141 = vmatpush1.bf16.msra.mxu0 %v102
    %142 = vmatprep.subr.bf16.mxu0 0
    %143 = vmatpush2.bf16.msra.mxu0 0
    %144 = vmatprep.subr.bf16.mxu0 0
    %145 = vmatpush2.bf16.msra.mxu0 0
    %146 = vmatprep.subr.bf16.mxu0 0
    %147 = vmatpush2.bf16.msra.mxu0 0
    %148 = vmatprep.subr.bf16.mxu0 0
    %149 = vmatpush2.bf16.msra.mxu0 0
    %150 = vmatprep.subr.bf16.mxu0 0
    %151 = vmatpush2.bf16.msra.mxu0 0
    %152 = vmatprep.subr.bf16.mxu0 0
    %153 = vmatpush2.bf16.msra.mxu0 0
    %154 = vmatprep.subr.bf16.mxu0 0
    %155 = vmatpush2.bf16.msra.mxu0 0
    %156 = vmatprep.subr.bf16.mxu0 0
    %157 = vmatpush2.bf16.msra.mxu0 0
    %158 = vmatprep.mubr.bf16.mxu0 0
    %159 = vmatmul.mubr.bf16.gmra.mxu0 %v117
    %v160 = vpop.f32.mrf.mxu0
    %v161 = vadd.f32 %v49, %v160
    %v162 = vpop.f32.mrf.mxu0
    %v163 = vpop.f32.mrf.mxu0
    %v164 = vadd.f32 %v54, %v163
    %v165 = vpop.f32.mrf.mxu0
    %166 = vmatprep.mubr.bf16.mxu0 0
    %167 = vmatmul.mubr.bf16.gmra.mxu0 %v120
    %v168 = vpop.f32.mrf.mxu0
    %v169 = vadd.f32 %v59, %v168
    %v170 = vpop.f32.mrf.mxu0
    %v171 = vpop.f32.mrf.mxu0
    %v172 = vadd.f32 %v64, %v171
    %v173 = vpop.f32.mrf.mxu0
    %174 = vdwg.mxu0
    %v175 = vmul.f32 %v161, 0.5
    %v176 = vmul.f32 %v164, 0.5
    %v177 = vmul.f32 %v169, 0.5
    %v178 = vmul.f32 %v172, 0.5
    %v179 = vtanh.pop %v175
    %v180 = vtanh.pop %v176
    %v181 = vtanh.pop %v177
    %v182 = vtanh.pop %v178
    %v183 = vmul.f32 %v179, 0.5
    %v184 = vmul.f32 %v180, 0.5
    %v185 = vmul.f32 %v181, 0.5
    %v186 = vmul.f32 %v182, 0.5
    %v187 = vadd.f32 %v183, 0.5
    %v188 = vadd.f32 %v184, 0.5
    %v189 = vadd.f32 %v185, 0.5
    %v190 = vadd.f32 %v186, 0.5
    %v191 = vld [vmem:[%s2] sm:$0xf]
    %v192 = vld [vmem:[%s2 + $0x4] sm:$0xf]
    %v193 = vpack.c.bf16 %v188, %v187
    %v194 = vpack.c.bf16 %v190, %v189
    %196 = vset.pattern.permute.xlu0 0
    %197 = vperm.xlu0 %196, %v26
    %v198 = vpop.permute.xlu0 %197
    %201 = vset.pattern.permute.xlu0 0
    %202 = vperm.xlu0 %201, %v27
    %v203 = vpop.permute.xlu0 %202
    %v207 = vunpack.c.l.b16 %v191
    %v208 = vunpack.c.l.b16 %v192
    %v209 = vpack.c.b16 %v208, %v207
    %vm210 = vcmask 261120
    %v212 = vsel %vm210, %v209, 0
    %214 = vmatprep.subr.bf16.mxu0 0
    %215 = vmatpush1.bf16.msra.mxu0 0
    %216 = vmatprep.subr.bf16.mxu0 0
    %217 = vmatpush1.bf16.msra.mxu0 0
    %218 = vmatprep.subr.bf16.mxu0 0
    %219 = vmatpush1.bf16.msra.mxu0 0
    %220 = vmatprep.subr.bf16.mxu0 0
    %221 = vmatpush1.bf16.msra.mxu0 0
    %222 = vmatprep.subr.bf16.mxu0 0
    %223 = vmatpush1.bf16.msra.mxu0 0
    %224 = vmatprep.subr.bf16.mxu0 0
    %225 = vmatpush1.bf16.msra.mxu0 0
    %226 = vmatprep.subr.bf16.mxu0 0
    %227 = vmatpush1.bf16.msra.mxu0 %v194
    %228 = vmatprep.subr.bf16.mxu0 0
    %229 = vmatpush1.bf16.msra.mxu0 %v193
    %230 = vmatprep.subr.bf16.mxu0 0
    %231 = vmatpush2.bf16.msra.mxu0 0
    %232 = vmatprep.subr.bf16.mxu0 0
    %233 = vmatpush2.bf16.msra.mxu0 0
    %234 = vmatprep.subr.bf16.mxu0 0
    %235 = vmatpush2.bf16.msra.mxu0 0
    %236 = vmatprep.subr.bf16.mxu0 0
    %237 = vmatpush2.bf16.msra.mxu0 0
    %238 = vmatprep.subr.bf16.mxu0 0
    %239 = vmatpush2.bf16.msra.mxu0 0
    %240 = vmatprep.subr.bf16.mxu0 0
    %241 = vmatpush2.bf16.msra.mxu0 0
    %242 = vmatprep.subr.bf16.mxu0 0
    %243 = vmatpush2.bf16.msra.mxu0 0
    %244 = vmatprep.subr.bf16.mxu0 0
    %245 = vmatpush2.bf16.msra.mxu0 0
    %246 = vmatprep.mubr.bf16.mxu0 0
    %247 = vmatmul.mubr.bf16.gmra.mxu0 %v212
    %v248 = vpop.f32.mrf.mxu0
    %v249 = vadd.f32 %v198, %v248
    %v250 = vpop.f32.mrf.mxu0
    %v251 = vpop.f32.mrf.mxu0
    %v252 = vadd.f32 %v203, %v251
    %v253 = vpop.f32.mrf.mxu0
    %254 = vdwg.mxu0
    %v255 = vmul.f32 %v249, 0.5
    %v256 = vmul.f32 %v252, 0.5
    %v257 = vtanh.pop %v255
    %v258 = vtanh.pop %v256
    %v259 = vmul.f32 %v257, 0.5
    %v260 = vmul.f32 %v258, 0.5
    %v261 = vadd.f32 %v259, 0.5
    %v262 = vadd.f32 %v260, 0.5
    %v263 = vld [vmem:[%s3] sm:$0xff]
    %v264 = vld [vmem:[%s3 + $0x8] sm:$0xff]
    %266 = vset.pattern.permute.xlu0 0
    %267 = vperm.xlu0 %266, %v263
    %v268 = vpop.permute.xlu0 %267
    %271 = vset.pattern.permute.xlu0 0
    %272 = vperm.xlu0 %271, %v264
    %v273 = vpop.permute.xlu0 %272
    %v275 = vmul.f32 %v261, %v268
    %v276 = vmul.f32 %v262, %v273
    %v277 = vadd.f32 %v275, %v276
    %v278 = vrot.slane %v277, 4
    %v279 = vadd.f32 %v277, %v278
    %v280 = vrot.slane %v279, 2
    %v281 = vadd.f32 %v279, %v280
    %v282 = vrot.slane %v281, 1
    %v283 = vadd.f32 %v281, %v282
    %285 = vset.pattern.permute.xlu0 0
    %286 = vperm.xlu0 %285, %v28
    %v287 = vpop.permute.xlu0 %286
    %v289 = vadd.f32 %v283, %v287
    %v290 = vmul.f32 %v289, 0.5
    %v291 = vtanh.pop %v290
    %v292 = vmul.f32 %v291, 0.5
    %v293 = vadd.f32 %v292, 0.5
    %294 = vst [vmem:[#allocation2] sm:$0x1] %v293
    // Predicated region
    $region22: #{tpu_custom_call.1} parent=1 // pred_check
      _
    $region23: #{tpu_custom_call.1} parent=1 // pred_check_branch
      %296 = sbr.rel (0) target = $region25
    $region24: #{tpu_custom_call.1} parent=1 // pred_region
      %s298 = ssub.s32 16, 16
      %299 = vsyncadd [#allocation3], %s298
      %s301 = sshll.u32 [#allocation2], 4
      %s302 = int_to_ptr.vmem [resolvable:$true] %s301
      %304 = dma.vmem_to_hbm [thread:$0]  %s302, 16, %s5, [#allocation3]
    $region25: #{tpu_custom_call.1} parent=1 // pred_fallthru
      _
    // Predicated region
    $region26: #{tpu_custom_call.1} parent=1 // pred_check
      _
    $region27: #{tpu_custom_call.1} parent=1 // pred_check_branch
      %306 = sbr.rel (0) target = $region29
    $region28: #{tpu_custom_call.1} parent=1 // pred_region
      %307 = dma.done [#allocation3], 16
    $region29: #{tpu_custom_call.1} parent=1 // pred_fallthru
      _
    %308 = vsyncpa [#allocation3], 1

</llo_original>
